<compile_context>
chip_gen: v5e
topology: v5e:2x2
jax: 0.10.0
libtpu: 0.0.40
codegen_flags: <defaults>
</compile_context>

<pallas_src>
import functools

import jax
import jax.numpy as jnp
from jax.experimental import pallas as pl
from jax.experimental.pallas import tpu as pltpu


def _round_up(v, m):
    return (v + m - 1) // m * m


def _augmean_classifier_kernel(x_ref, xf_ref, w_ref, b_ref, o_ref, *, w_base, w_flip):
    """Single-step tile: augmentation mean (VPU) + classifier matmul (MXU) + bias.

    x_ref : (bm, F)  original flattened images (one M-tile)
    xf_ref: (bm, F)  flipped  flattened images (one M-tile)
    w_ref : (F, Kp)  classifier weight (lane-padded)
    b_ref : (1, Kp)  classifier bias   (lane-padded)
    o_ref : (bm, Kp) logits of the augmentation mean
    """
    # mean over [x] + [flip(x)]*(I-1)  ==  (1/I)*x + ((I-1)/I)*flip(x)
    x_mean = x_ref[...] * w_base + xf_ref[...] * w_flip
    o_ref[...] = (
        jnp.dot(x_mean, w_ref[...], preferred_element_type=jnp.float32) + b_ref[...]
    ).astype(o_ref.dtype)


def augment_fwd(x, w, bias, *, iterations=4):
    """AUGMENT_FWD forward (cifar10 branch: iterations=4, mean=True).

    x    : (b, c, h, w) float32, NCHW
    w    : (c*h*w, K)   float32 classifier weight
    bias : (K,)         float32 classifier bias
    returns (b, K) float32 = mean_i classifier(aug_i(x))
    """
    b, c, h, wd = x.shape
    feat = c * h * wd
    k = w.shape[1]

    # Stand-in deterministic augmentation (see TODO above).
    flipped = x[..., ::-1]
    x2d = x.reshape(b, feat)
    xf2d = flipped.reshape(b, feat)

    # Sublane-dense M padding + M-tiling; lane-dense K padding.
    if b <= 128:
        bp = _round_up(b, 8)
        bm = bp
    else:
        bp = _round_up(b, 128)
        bm = 128
    kp = _round_up(k, 128)

    if bp != b:
        row_pad = ((0, bp - b), (0, 0))
        x2d = jnp.pad(x2d, row_pad)
        xf2d = jnp.pad(xf2d, row_pad)
    w_p = jnp.pad(w, ((0, 0), (0, kp - k))) if kp != k else w
    bias_p = jnp.pad(bias, (0, kp - k)) if kp != k else bias
    bias2d = bias_p.reshape(1, kp)

    kernel = functools.partial(
        _augmean_classifier_kernel,
        w_base=1.0 / iterations,
        w_flip=(iterations - 1) / iterations,
    )

    out = pl.pallas_call(
        kernel,
        out_shape=jax.ShapeDtypeStruct((bp, kp), jnp.float32),
        grid=(bp // bm,),
        in_specs=[
            pl.BlockSpec((bm, feat), lambda i: (i, 0)),   # x tile
            pl.BlockSpec((bm, feat), lambda i: (i, 0)),   # flip(x) tile
            pl.BlockSpec((feat, kp), lambda i: (0, 0)),   # W (resident)
            pl.BlockSpec((1, kp), lambda i: (0, 0)),      # bias (resident)
        ],
        out_specs=pl.BlockSpec((bm, kp), lambda i: (i, 0)),
        compiler_params=pltpu.CompilerParams(
            dimension_semantics=("parallel",),
        ),
    )(x2d, xf2d, w_p, bias2d)

    return out[:b, :k]


if __name__ == "__main__":
    # Small shapes consistent with the module: cifar10-like images.
    B, C, H, W = 2, 4, 16, 16
    NUM_CLASSES = 16
    ITERS = 4  # cifar10 branch: iterations=4, mean=True

    key = jax.random.PRNGKey(0)
    kx, kw, kb = jax.random.split(key, 3)
    x = jax.random.normal(kx, (B, C, H, W), dtype=jnp.float32)
    w = jax.random.normal(kw, (C * H * W, NUM_CLASSES), dtype=jnp.float32) * 0.02
    bias = jax.random.normal(kb, (NUM_CLASSES,), dtype=jnp.float32) * 0.01

    out = augment_fwd(x, w, bias, iterations=ITERS)
    out = jax.block_until_ready(out)

    # Pure-JAX reference of the original semantics:
    # logits for each of the I augmented copies, then mean over I.
    flipped = x[..., ::-1]
    x_aug = jnp.stack([x] + [flipped] * (ITERS - 1), 0).reshape(ITERS, B, -1)
    ref = jnp.mean(x_aug @ w + bias, axis=0)

    assert out.shape == (B, NUM_CLASSES)
    assert jnp.allclose(out, ref, atol=1e-4, rtol=1e-4)

    print("KERNEL_OK")
</pallas_src>

<mosaic_0001>
module attributes {stable_mosaic.version = 11 : i64} {
  func.func @_augmean_classifier_kernel(%arg0: i32, %arg1: memref<8x1024xf32, #tpu.memory_space<vmem>>, %arg2: memref<8x1024xf32, #tpu.memory_space<vmem>>, %arg3: memref<1024x128xf32, #tpu.memory_space<vmem>>, %arg4: memref<1x128xf32, #tpu.memory_space<vmem>>, %arg5: memref<8x128xf32, #tpu.memory_space<vmem>>) attributes {dimension_semantics = [#tpu.dimension_semantics<parallel>], iteration_bounds = array<i64: 1>, scalar_prefetch = 0 : i64, scratch_operands = 0 : i64, tpu.core_type = #tpu.core_type<tc>, window_params = [{transform_indices = @transform_0, window_bounds = array<i64: 8, 1024>}, {transform_indices = @transform_1, window_bounds = array<i64: 8, 1024>}, {pipeline_mode = #tpu.pipeline_mode<synchronous>, transform_indices = @transform_2, window_bounds = array<i64: 1024, 128>}, {pipeline_mode = #tpu.pipeline_mode<synchronous>, transform_indices = @transform_3, window_bounds = array<i64: 1, 128>}, {transform_indices = @transform_4, window_bounds = array<i64: 8, 128>}]} {
    %c0 = arith.constant 0 : index
    %c0_0 = arith.constant 0 : index
    %0 = vector.load %arg1[%c0, %c0_0] : memref<8x1024xf32, #tpu.memory_space<vmem>>, vector<8x1024xf32>
    %cst = arith.constant 2.500000e-01 : f32
    %1 = vector.broadcast %cst : f32 to vector<8x1024xf32>
    %2 = arith.mulf %0, %1 : vector<8x1024xf32>
    %c0_1 = arith.constant 0 : index
    %c0_2 = arith.constant 0 : index
    %3 = vector.load %arg2[%c0_1, %c0_2] : memref<8x1024xf32, #tpu.memory_space<vmem>>, vector<8x1024xf32>
    %cst_3 = arith.constant 7.500000e-01 : f32
    %4 = vector.broadcast %cst_3 : f32 to vector<8x1024xf32>
    %5 = arith.mulf %3, %4 : vector<8x1024xf32>
    %6 = arith.addf %2, %5 : vector<8x1024xf32>
    %c0_4 = arith.constant 0 : index
    %c0_5 = arith.constant 0 : index
    %7 = vector.load %arg3[%c0_4, %c0_5] : memref<1024x128xf32, #tpu.memory_space<vmem>>, vector<1024x128xf32>
    %cst_6 = arith.constant dense<0.000000e+00> : vector<8x128xf32>
    %8 = tpu.matmul %6, %7, %cst_6 {dimension_numbers = #tpu.dot_dimension_numbers<[1], [0], [0], [1], [0, 0, 1, 1], [], []>} : vector<8x1024xf32>, vector<1024x128xf32>, vector<8x128xf32> -> vector<8x128xf32>
    %c0_7 = arith.constant 0 : index
    %c0_8 = arith.constant 0 : index
    %9 = vector.load %arg4[%c0_7, %c0_8] : memref<1x128xf32, #tpu.memory_space<vmem>>, vector<1x128xf32>
    %10 = vector.broadcast %9 : vector<1x128xf32> to vector<8x128xf32>
    %11 = arith.addf %8, %10 : vector<8x128xf32>
    %c0_9 = arith.constant 0 : index
    %c0_10 = arith.constant 0 : index
    %12 = vector.load %arg5[%c0_9, %c0_10] : memref<8x128xf32, #tpu.memory_space<vmem>>, vector<8x128xf32>
    tpu.vector_store %arg5[%c0_9, %c0_10], %11 {strides = array<i32>} : memref<8x128xf32, #tpu.memory_space<vmem>>, vector<8x128xf32>,
    return
  }
  func.func @transform_0(%arg0: i32) -> (i32, i32) {
    %c0_i32 = arith.constant 0 : i32
    %c0_i32_0 = arith.constant 0 : i32
    return %arg0, %c0_i32 : i32, i32
  }
  func.func @transform_1(%arg0: i32) -> (i32, i32) {
    %c0_i32 = arith.constant 0 : i32
    %c0_i32_0 = arith.constant 0 : i32
    return %arg0, %c0_i32 : i32, i32
  }
  func.func @transform_2(%arg0: i32) -> (i32, i32) {
    %c0_i32 = arith.constant 0 : i32
    %c0_i32_0 = arith.constant 0 : i32
    %c0_i32_1 = arith.constant 0 : i32
    return %c0_i32, %c0_i32_0 : i32, i32
  }
  func.func @transform_3(%arg0: i32) -> (i32, i32) {
    %c0_i32 = arith.constant 0 : i32
    %c0_i32_0 = arith.constant 0 : i32
    %c0_i32_1 = arith.constant 0 : i32
    return %c0_i32, %c0_i32_0 : i32, i32
  }
  func.func @transform_4(%arg0: i32) -> (i32, i32) {
    %c0_i32 = arith.constant 0 : i32
    %c0_i32_0 = arith.constant 0 : i32
    return %arg0, %c0_i32 : i32, i32
  }
}

</mosaic_0001>

<llo_original>
// kernel: tpu_custom_call.1
$region0: #{tpu_custom_call.1}
  #allocation0 [shape = 'u32[]', space=smem, size = 0x4, offset = 0x4, fixed_abs, tag = 'smem constant byte address 0x4 - core index']
  #allocation1 [shape = 'u32[72,128]{1,0:T(1,128)}', space=vmem, size = 0x9000, scoped, tag = 'internal scratch']
  %s0 = inlined_call_operand.hbm [shape: f32[8,1024], index: 0, kind: input, shape index: {}]
  %s1 = inlined_call_operand.hbm [shape: f32[8,1024], index: 1, kind: input, shape index: {}]
  %s2 = inlined_call_operand.hbm [shape: f32[1024,128], index: 2, kind: input, shape index: {}]
  %s3 = inlined_call_operand.vmem [shape: f32[1,128], index: 3, kind: input, shape index: {}]
  %s4 = inlined_call_operand.hbm [shape: f32[8,128], index: 4, kind: output, shape index: {}]
  %s5 = sld [smem:[#allocation0]]
  $region38: #{tpu_custom_call.1} parent=0
    _
  %s7 = ssub.s32 1, %s5
  %s8 = scalar_select 0, %s7, %s5
  $region1: #{tpu_custom_call.1} parent=0
    #allocation2 [shape = 'u8[32768]{0}', space=vmem, size = 0x8000, scoped, tag = 'input window, operand 0, single buffered']
    #allocation3 [shape = 's32[1]{0}', space=sflag, size = 0x4, scoped, tag = 'scoped memory for tpu_custom_call.1']
    #allocation4 [shape = 's32[1]{0}', space=sflag, size = 0x4, scoped, tag = 'scoped memory for tpu_custom_call.1']
    #allocation5 [shape = 'u8[32768]{0}', space=vmem, size = 0x8000, scoped, tag = 'input window, operand 1, single buffered']
    #allocation6 [shape = 's32[1]{0}', space=sflag, size = 0x4, scoped, tag = 'scoped memory for tpu_custom_call.1']
    #allocation7 [shape = 'u8[524288]{0}', space=vmem, size = 0x80000, scoped, tag = 'input window, operand 2, single buffered']
    #allocation8 [shape = 'u8[4096]{0}', space=vmem, size = 0x1000, scoped, tag = 'output window, operand 0, single buffered']
    %9 = vsyncpa [#allocation3], 0
    %10 = vsyncpa [#allocation6], 0
    %11 = vsyncpa [#allocation4], 0
    // Predicated region
    $region2: #{tpu_custom_call.1} parent=1 // pred_check
      _
    $region3: #{tpu_custom_call.1} parent=1 // pred_check_branch
      %13 = sbr.rel (0) target = $region5
    $region4: #{tpu_custom_call.1} parent=1 // pred_region
      %15 = vsyncadd [#allocation3], 0
      %s17 = sshll.u32 %s0, 4
      %s18 = int_to_ptr.hbm [resolvable:$true] %s17
      %s19 = sshll.u32 [#allocation2], 4
      %s20 = int_to_ptr.vmem [resolvable:$true] %s19
      %22 = dma.hbm_to_vmem [thread:$0]  %s18, 1024, %s20, [#allocation3]
    $region5: #{tpu_custom_call.1} parent=1 // pred_fallthru
      _
    // Predicated region
    $region6: #{tpu_custom_call.1} parent=1 // pred_check
      _
    $region7: #{tpu_custom_call.1} parent=1 // pred_check_branch
      %24 = sbr.rel (0) target = $region9
    $region8: #{tpu_custom_call.1} parent=1 // pred_region
      %26 = vsyncadd [#allocation6], 0
      %s28 = sshll.u32 %s1, 4
      %s29 = int_to_ptr.hbm [resolvable:$true] %s28
      %s30 = sshll.u32 [#allocation5], 4
      %s31 = int_to_ptr.vmem [resolvable:$true] %s30
      %33 = dma.hbm_to_vmem [thread:$0]  %s29, 1024, %s31, [#allocation6]
    $region9: #{tpu_custom_call.1} parent=1 // pred_fallthru
      _
    // Predicated region
    $region10: #{tpu_custom_call.1} parent=1 // pred_check
      _
    $region11: #{tpu_custom_call.1} parent=1 // pred_check_branch
      %35 = sbr.rel (0) target = $region13
    $region12: #{tpu_custom_call.1} parent=1 // pred_region
      %37 = vsyncadd [#allocation6], 0
      %s38 = sshll.u32 %s2, 4
      %s39 = int_to_ptr.hbm [resolvable:$true] %s38
      %s40 = sshll.u32 [#allocation7], 4
      %s41 = int_to_ptr.vmem [resolvable:$true] %s40
      %46 = dma.hbm_to_vmem [thread:$0]  %s39, 16384, %s41, [#allocation6], 128, 128, 8
    $region13: #{tpu_custom_call.1} parent=1 // pred_fallthru
      _
    // Predicated region
    $region14: #{tpu_custom_call.1} parent=1 // pred_check
      _
    $region15: #{tpu_custom_call.1} parent=1 // pred_check_branch
      %48 = sbr.rel (0) target = $region17
    $region16: #{tpu_custom_call.1} parent=1 // pred_region
      _
    $region17: #{tpu_custom_call.1} parent=1 // pred_fallthru
      _
    // Predicated region
    $region18: #{tpu_custom_call.1} parent=1 // pred_check
      _
    $region19: #{tpu_custom_call.1} parent=1 // pred_check_branch
      %50 = sbr.rel (0) target = $region21
    $region20: #{tpu_custom_call.1} parent=1 // pred_region
      %52 = dma.done [#allocation3], 1024
    $region21: #{tpu_custom_call.1} parent=1 // pred_fallthru
      _
    // Predicated region
    $region22: #{tpu_custom_call.1} parent=1 // pred_check
      _
    $region23: #{tpu_custom_call.1} parent=1 // pred_check_branch
      %54 = sbr.rel (0) target = $region25
    $region24: #{tpu_custom_call.1} parent=1 // pred_region
      %56 = dma.done [#allocation6], 1024
    $region25: #{tpu_custom_call.1} parent=1 // pred_fallthru
      _
    // Predicated region
    $region26: #{tpu_custom_call.1} parent=1 // pred_check
      _
    $region27: #{tpu_custom_call.1} parent=1 // pred_check_branch
      %58 = sbr.rel (0) target = $region29
    $region28: #{tpu_custom_call.1} parent=1 // pred_region
      %60 = dma.done [#allocation6], 16384
    $region29: #{tpu_custom_call.1} parent=1 // pred_fallthru
      _
    %v61 = vld [vmem:[#allocation2] sm:$0xff]
    %v62 = vld [vmem:[#allocation2 + $0x8] sm:$0xff]
    %v63 = vld [vmem:[#allocation2 + $0x10] sm:$0xff]
    %v64 = vld [vmem:[#allocation2 + $0x18] sm:$0xff]
    %v65 = vld [vmem:[#allocation2 + $0x20] sm:$0xff]
    %v66 = vld [vmem:[#allocation2 + $0x28] sm:$0xff]
    %v67 = vld [vmem:[#allocation2 + $0x30] sm:$0xff]
    %v68 = vld [vmem:[#allocation2 + $0x38] sm:$0xff]
    %v69 = vmul.f32 %v61, 0.25
    %v70 = vmul.f32 %v62, 0.25
    %v71 = vmul.f32 %v63, 0.25
    %v72 = vmul.f32 %v64, 0.25
    %v73 = vmul.f32 %v65, 0.25
    %v74 = vmul.f32 %v66, 0.25
    %v75 = vmul.f32 %v67, 0.25
    %v76 = vmul.f32 %v68, 0.25
    %v77 = vld [vmem:[#allocation5] sm:$0xff]
    %v78 = vld [vmem:[#allocation5 + $0x8] sm:$0xff]
    %v79 = vld [vmem:[#allocation5 + $0x10] sm:$0xff]
    %v80 = vld [vmem:[#allocation5 + $0x18] sm:$0xff]
    %v81 = vld [vmem:[#allocation5 + $0x20] sm:$0xff]
    %v82 = vld [vmem:[#allocation5 + $0x28] sm:$0xff]
    %v83 = vld [vmem:[#allocation5 + $0x30] sm:$0xff]
    %v84 = vld [vmem:[#allocation5 + $0x38] sm:$0xff]
    %v85 = vmul.f32 %v77, 0.75
    %v86 = vmul.f32 %v78, 0.75
    %v87 = vmul.f32 %v79, 0.75
    %v88 = vmul.f32 %v80, 0.75
    %v89 = vmul.f32 %v81, 0.75
    %v90 = vmul.f32 %v82, 0.75
    %v91 = vmul.f32 %v83, 0.75
    %v92 = vmul.f32 %v84, 0.75
    %v93 = vadd.f32 %v69, %v85
    %v94 = vadd.f32 %v70, %v86
    %v95 = vadd.f32 %v71, %v87
    %v96 = vadd.f32 %v72, %v88
    %v97 = vadd.f32 %v73, %v89
    %v98 = vadd.f32 %v74, %v90
    %v99 = vadd.f32 %v75, %v91
    %v100 = vadd.f32 %v76, %v92
    %v101 = vld [vmem:[#allocation7] sm:$0xff]
    %v102 = vld [vmem:[#allocation7 + $0x8] sm:$0xff]
    %v103 = vld [vmem:[#allocation7 + $0x10] sm:$0xff]
    %v104 = vld [vmem:[#allocation7 + $0x18] sm:$0xff]
    %v105 = vld [vmem:[#allocation7 + $0x20] sm:$0xff]
    %v106 = vld [vmem:[#allocation7 + $0x28] sm:$0xff]
    %v107 = vld [vmem:[#allocation7 + $0x30] sm:$0xff]
    %v108 = vld [vmem:[#allocation7 + $0x38] sm:$0xff]
    %v109 = vld [vmem:[#allocation7 + $0x40] sm:$0xff]
    %v110 = vld [vmem:[#allocation7 + $0x48] sm:$0xff]
    %v111 = vld [vmem:[#allocation7 + $0x50] sm:$0xff]
    %v112 = vld [vmem:[#allocation7 + $0x58] sm:$0xff]
    %v113 = vld [vmem:[#allocation7 + $0x60] sm:$0xff]
    %v114 = vld [vmem:[#allocation7 + $0x68] sm:$0xff]
    %v115 = vld [vmem:[#allocation7 + $0x70] sm:$0xff]
    %v116 = vld [vmem:[#allocation7 + $0x78] sm:$0xff]
    %v117 = vld [vmem:[#allocation7 + $0x80] sm:$0xff]
    %v118 = vld [vmem:[#allocation7 + $0x88] sm:$0xff]
    %v119 = vld [vmem:[#allocation7 + $0x90] sm:$0xff]
    %v120 = vld [vmem:[#allocation7 + $0x98] sm:$0xff]
    %v121 = vld [vmem:[#allocation7 + $0xa0] sm:$0xff]
    %v122 = vld [vmem:[#allocation7 + $0xa8] sm:$0xff]
    %v123 = vld [vmem:[#allocation7 + $0xb0] sm:$0xff]
    %v124 = vld [vmem:[#allocation7 + $0xb8] sm:$0xff]
    %v125 = vld [vmem:[#allocation7 + $0xc0] sm:$0xff]
    %v126 = vld [vmem:[#allocation7 + $0xc8] sm:$0xff]
    %v127 = vld [vmem:[#allocation7 + $0xd0] sm:$0xff]
    %v128 = vld [vmem:[#allocation7 + $0xd8] sm:$0xff]
    %v129 = vld [vmem:[#allocation7 + $0xe0] sm:$0xff]
    %v130 = vld [vmem:[#allocation7 + $0xe8] sm:$0xff]
    %v131 = vld [vmem:[#allocation7 + $0xf0] sm:$0xff]
    %v132 = vld [vmem:[#allocation7 + $0xf8] sm:$0xff]
    %v133 = vld [vmem:[#allocation7 + $0x100] sm:$0xff]
    %v134 = vld [vmem:[#allocation7 + $0x108] sm:$0xff]
    %v135 = vld [vmem:[#allocation7 + $0x110] sm:$0xff]
    %v136 = vld [vmem:[#allocation7 + $0x118] sm:$0xff]
    %v137 = vld [vmem:[#allocation7 + $0x120] sm:$0xff]
    %v138 = vld [vmem:[#allocation7 + $0x128] sm:$0xff]
    %v139 = vld [vmem:[#allocation7 + $0x130] sm:$0xff]
    %v140 = vld [vmem:[#allocation7 + $0x138] sm:$0xff]
    %v141 = vld [vmem:[#allocation7 + $0x140] sm:$0xff]
    %v142 = vld [vmem:[#allocation7 + $0x148] sm:$0xff]
    %v143 = vld [vmem:[#allocation7 + $0x150] sm:$0xff]
    %v144 = vld [vmem:[#allocation7 + $0x158] sm:$0xff]
    %v145 = vld [vmem:[#allocation7 + $0x160] sm:$0xff]
    %v146 = vld [vmem:[#allocation7 + $0x168] sm:$0xff]
    %v147 = vld [vmem:[#allocation7 + $0x170] sm:$0xff]
    %v148 = vld [vmem:[#allocation7 + $0x178] sm:$0xff]
    %v149 = vld [vmem:[#allocation7 + $0x180] sm:$0xff]
    %v150 = vld [vmem:[#allocation7 + $0x188] sm:$0xff]
    %v151 = vld [vmem:[#allocation7 + $0x190] sm:$0xff]
    %v152 = vld [vmem:[#allocation7 + $0x198] sm:$0xff]
    %v153 = vld [vmem:[#allocation7 + $0x1a0] sm:$0xff]
    %v154 = vld [vmem:[#allocation7 + $0x1a8] sm:$0xff]
    %v155 = vld [vmem:[#allocation7 + $0x1b0] sm:$0xff]
    %v156 = vld [vmem:[#allocation7 + $0x1b8] sm:$0xff]
    %v157 = vld [vmem:[#allocation7 + $0x1c0] sm:$0xff]
    %v158 = vld [vmem:[#allocation7 + $0x1c8] sm:$0xff]
    %v159 = vld [vmem:[#allocation7 + $0x1d0] sm:$0xff]
    %v160 = vld [vmem:[#allocation7 + $0x1d8] sm:$0xff]
    %v161 = vld [vmem:[#allocation7 + $0x1e0] sm:$0xff]
    %v162 = vld [vmem:[#allocation7 + $0x1e8] sm:$0xff]
    %v163 = vld [vmem:[#allocation7 + $0x1f0] sm:$0xff]
    %v164 = vld [vmem:[#allocation7 + $0x1f8] sm:$0xff]
    %v165 = vld [vmem:[#allocation7 + $0x200] sm:$0xff]
    %v166 = vld [vmem:[#allocation7 + $0x208] sm:$0xff]
    %v167 = vld [vmem:[#allocation7 + $0x210] sm:$0xff]
    %v168 = vld [vmem:[#allocation7 + $0x218] sm:$0xff]
    %v169 = vld [vmem:[#allocation7 + $0x220] sm:$0xff]
    %v170 = vld [vmem:[#allocation7 + $0x228] sm:$0xff]
    %v171 = vld [vmem:[#allocation7 + $0x230] sm:$0xff]
    %v172 = vld [vmem:[#allocation7 + $0x238] sm:$0xff]
    %v173 = vld [vmem:[#allocation7 + $0x240] sm:$0xff]
    %v174 = vld [vmem:[#allocation7 + $0x248] sm:$0xff]
    %v175 = vld [vmem:[#allocation7 + $0x250] sm:$0xff]
    %v176 = vld [vmem:[#allocation7 + $0x258] sm:$0xff]
    %v177 = vld [vmem:[#allocation7 + $0x260] sm:$0xff]
    %v178 = vld [vmem:[#allocation7 + $0x268] sm:$0xff]
    %v179 = vld [vmem:[#allocation7 + $0x270] sm:$0xff]
    %v180 = vld [vmem:[#allocation7 + $0x278] sm:$0xff]
    %v181 = vld [vmem:[#allocation7 + $0x280] sm:$0xff]
    %v182 = vld [vmem:[#allocation7 + $0x288] sm:$0xff]
    %v183 = vld [vmem:[#allocation7 + $0x290] sm:$0xff]
    %v184 = vld [vmem:[#allocation7 + $0x298] sm:$0xff]
    %v185 = vld [vmem:[#allocation7 + $0x2a0] sm:$0xff]
    %v186 = vld [vmem:[#allocation7 + $0x2a8] sm:$0xff]
    %v187 = vld [vmem:[#allocation7 + $0x2b0] sm:$0xff]
    %v188 = vld [vmem:[#allocation7 + $0x2b8] sm:$0xff]
    %v189 = vld [vmem:[#allocation7 + $0x2c0] sm:$0xff]
    %v190 = vld [vmem:[#allocation7 + $0x2c8] sm:$0xff]
    %v191 = vld [vmem:[#allocation7 + $0x2d0] sm:$0xff]
    %v192 = vld [vmem:[#allocation7 + $0x2d8] sm:$0xff]
    %v193 = vld [vmem:[#allocation7 + $0x2e0] sm:$0xff]
    %v194 = vld [vmem:[#allocation7 + $0x2e8] sm:$0xff]
    %v195 = vld [vmem:[#allocation7 + $0x2f0] sm:$0xff]
    %v196 = vld [vmem:[#allocation7 + $0x2f8] sm:$0xff]
    %v197 = vld [vmem:[#allocation7 + $0x300] sm:$0xff]
    %v198 = vld [vmem:[#allocation7 + $0x308] sm:$0xff]
    %v199 = vld [vmem:[#allocation7 + $0x310] sm:$0xff]
    %v200 = vld [vmem:[#allocation7 + $0x318] sm:$0xff]
    %v201 = vld [vmem:[#allocation7 + $0x320] sm:$0xff]
    %v202 = vld [vmem:[#allocation7 + $0x328] sm:$0xff]
    %v203 = vld [vmem:[#allocation7 + $0x330] sm:$0xff]
    %v204 = vld [vmem:[#allocation7 + $0x338] sm:$0xff]
    %v205 = vld [vmem:[#allocation7 + $0x340] sm:$0xff]
    %v206 = vld [vmem:[#allocation7 + $0x348] sm:$0xff]
    %v207 = vld [vmem:[#allocation7 + $0x350] sm:$0xff]
    %v208 = vld [vmem:[#allocation7 + $0x358] sm:$0xff]
    %v209 = vld [vmem:[#allocation7 + $0x360] sm:$0xff]
    %v210 = vld [vmem:[#allocation7 + $0x368] sm:$0xff]
    %v211 = vld [vmem:[#allocation7 + $0x370] sm:$0xff]
    %v212 = vld [vmem:[#allocation7 + $0x378] sm:$0xff]
    %v213 = vld [vmem:[#allocation7 + $0x380] sm:$0xff]
    %v214 = vld [vmem:[#allocation7 + $0x388] sm:$0xff]
    %v215 = vld [vmem:[#allocation7 + $0x390] sm:$0xff]
    %v216 = vld [vmem:[#allocation7 + $0x398] sm:$0xff]
    %v217 = vld [vmem:[#allocation7 + $0x3a0] sm:$0xff]
    %v218 = vld [vmem:[#allocation7 + $0x3a8] sm:$0xff]
    %v219 = vld [vmem:[#allocation7 + $0x3b0] sm:$0xff]
    %v220 = vld [vmem:[#allocation7 + $0x3b8] sm:$0xff]
    %v221 = vld [vmem:[#allocation7 + $0x3c0] sm:$0xff]
    %v222 = vld [vmem:[#allocation7 + $0x3c8] sm:$0xff]
    %v223 = vld [vmem:[#allocation7 + $0x3d0] sm:$0xff]
    %v224 = vld [vmem:[#allocation7 + $0x3d8] sm:$0xff]
    %v225 = vld [vmem:[#allocation7 + $0x3e0] sm:$0xff]
    %v226 = vld [vmem:[#allocation7 + $0x3e8] sm:$0xff]
    %v227 = vld [vmem:[#allocation7 + $0x3f0] sm:$0xff]
    %v228 = vld [vmem:[#allocation7 + $0x3f8] sm:$0xff]
    %v229 = vld [vmem:[%s3] sm:$0x1]
    %v231 = vperm.slane %v229, 0
    %233 = vmatpush.msra.mxu0 %v116
    %234 = vmatpush.msra.mxu0 %v115
    %235 = vmatpush.msra.mxu0 %v114
    %236 = vmatpush.msra.mxu0 %v113
    %237 = vmatpush.msra.mxu0 %v112
    %238 = vmatpush.msra.mxu0 %v111
    %239 = vmatpush.msra.mxu0 %v110
    %240 = vmatpush.msra.mxu0 %v109
    %241 = vmatpush.msra.mxu0 %v108
    %242 = vmatpush.msra.mxu0 %v107
    %243 = vmatpush.msra.mxu0 %v106
    %244 = vmatpush.msra.mxu0 %v105
    %245 = vmatpush.msra.mxu0 %v104
    %246 = vmatpush.msra.mxu0 %v103
    %247 = vmatpush.msra.mxu0 %v102
    %248 = vmatpush.msra.mxu0 %v101
    %249 = vmatmul.f32.gmra.mxu0 %v93
    %v250 = vpop.f32.mrf.mxu0
    %v251 = vadd.f32 %v231, %v250
    %252 = vdwg.mxu0
    %253 = vmatpush.msra.mxu0 %v132
    %254 = vmatpush.msra.mxu0 %v131
    %255 = vmatpush.msra.mxu0 %v130
    %256 = vmatpush.msra.mxu0 %v129
    %257 = vmatpush.msra.mxu0 %v128
    %258 = vmatpush.msra.mxu0 %v127
    %259 = vmatpush.msra.mxu0 %v126
    %260 = vmatpush.msra.mxu0 %v125
    %261 = vmatpush.msra.mxu0 %v124
    %262 = vmatpush.msra.mxu0 %v123
    %263 = vmatpush.msra.mxu0 %v122
    %264 = vmatpush.msra.mxu0 %v121
    %265 = vmatpush.msra.mxu0 %v120
    %266 = vmatpush.msra.mxu0 %v119
    %267 = vmatpush.msra.mxu0 %v118
    %268 = vmatpush.msra.mxu0 %v117
    %269 = vmatmul.f32.gmra.mxu0 %v94
    %v270 = vpop.f32.mrf.mxu0
    %v271 = vadd.f32 %v251, %v270
    %272 = vdwg.mxu0
    %273 = vmatpush.msra.mxu0 %v148
    %274 = vmatpush.msra.mxu0 %v147
    %275 = vmatpush.msra.mxu0 %v146
    %276 = vmatpush.msra.mxu0 %v145
    %277 = vmatpush.msra.mxu0 %v144
    %278 = vmatpush.msra.mxu0 %v143
    %279 = vmatpush.msra.mxu0 %v142
    %280 = vmatpush.msra.mxu0 %v141
    %281 = vmatpush.msra.mxu0 %v140
    %282 = vmatpush.msra.mxu0 %v139
    %283 = vmatpush.msra.mxu0 %v138
    %284 = vmatpush.msra.mxu0 %v137
    %285 = vmatpush.msra.mxu0 %v136
    %286 = vmatpush.msra.mxu0 %v135
    %287 = vmatpush.msra.mxu0 %v134
    %288 = vmatpush.msra.mxu0 %v133
    %289 = vmatmul.f32.gmra.mxu0 %v95
    %v290 = vpop.f32.mrf.mxu0
    %v291 = vadd.f32 %v271, %v290
    %292 = vdwg.mxu0
    %293 = vmatpush.msra.mxu0 %v164
    %294 = vmatpush.msra.mxu0 %v163
    %295 = vmatpush.msra.mxu0 %v162
    %296 = vmatpush.msra.mxu0 %v161
    %297 = vmatpush.msra.mxu0 %v160
    %298 = vmatpush.msra.mxu0 %v159
    %299 = vmatpush.msra.mxu0 %v158
    %300 = vmatpush.msra.mxu0 %v157
    %301 = vmatpush.msra.mxu0 %v156
    %302 = vmatpush.msra.mxu0 %v155
    %303 = vmatpush.msra.mxu0 %v154
    %304 = vmatpush.msra.mxu0 %v153
    %305 = vmatpush.msra.mxu0 %v152
    %306 = vmatpush.msra.mxu0 %v151
    %307 = vmatpush.msra.mxu0 %v150
    %308 = vmatpush.msra.mxu0 %v149
    %309 = vmatmul.f32.gmra.mxu0 %v96
    %v310 = vpop.f32.mrf.mxu0
    %v311 = vadd.f32 %v291, %v310
    %312 = vdwg.mxu0
    %313 = vmatpush.msra.mxu0 %v180
    %314 = vmatpush.msra.mxu0 %v179
    %315 = vmatpush.msra.mxu0 %v178
    %316 = vmatpush.msra.mxu0 %v177
    %317 = vmatpush.msra.mxu0 %v176
    %318 = vmatpush.msra.mxu0 %v175
    %319 = vmatpush.msra.mxu0 %v174
    %320 = vmatpush.msra.mxu0 %v173
    %321 = vmatpush.msra.mxu0 %v172
    %322 = vmatpush.msra.mxu0 %v171
    %323 = vmatpush.msra.mxu0 %v170
    %324 = vmatpush.msra.mxu0 %v169
    %325 = vmatpush.msra.mxu0 %v168
    %326 = vmatpush.msra.mxu0 %v167
    %327 = vmatpush.msra.mxu0 %v166
    %328 = vmatpush.msra.mxu0 %v165
    %329 = vmatmul.f32.gmra.mxu0 %v97
    %v330 = vpop.f32.mrf.mxu0
    %v331 = vadd.f32 %v311, %v330
    %332 = vdwg.mxu0
    %333 = vmatpush.msra.mxu0 %v196
    %334 = vmatpush.msra.mxu0 %v195
    %335 = vmatpush.msra.mxu0 %v194
    %336 = vmatpush.msra.mxu0 %v193
    %337 = vmatpush.msra.mxu0 %v192
    %338 = vmatpush.msra.mxu0 %v191
    %339 = vmatpush.msra.mxu0 %v190
    %340 = vmatpush.msra.mxu0 %v189
    %341 = vmatpush.msra.mxu0 %v188
    %342 = vmatpush.msra.mxu0 %v187
    %343 = vmatpush.msra.mxu0 %v186
    %344 = vmatpush.msra.mxu0 %v185
    %345 = vmatpush.msra.mxu0 %v184
    %346 = vmatpush.msra.mxu0 %v183
    %347 = vmatpush.msra.mxu0 %v182
    %348 = vmatpush.msra.mxu0 %v181
    %349 = vmatmul.f32.gmra.mxu0 %v98
    %v350 = vpop.f32.mrf.mxu0
    %v351 = vadd.f32 %v331, %v350
    %352 = vdwg.mxu0
    %353 = vmatpush.msra.mxu0 %v212
    %354 = vmatpush.msra.mxu0 %v211
    %355 = vmatpush.msra.mxu0 %v210
    %356 = vmatpush.msra.mxu0 %v209
    %357 = vmatpush.msra.mxu0 %v208
    %358 = vmatpush.msra.mxu0 %v207
    %359 = vmatpush.msra.mxu0 %v206
    %360 = vmatpush.msra.mxu0 %v205
    %361 = vmatpush.msra.mxu0 %v204
    %362 = vmatpush.msra.mxu0 %v203
    %363 = vmatpush.msra.mxu0 %v202
    %364 = vmatpush.msra.mxu0 %v201
    %365 = vmatpush.msra.mxu0 %v200
    %366 = vmatpush.msra.mxu0 %v199
    %367 = vmatpush.msra.mxu0 %v198
    %368 = vmatpush.msra.mxu0 %v197
    %369 = vmatmul.f32.gmra.mxu0 %v99
    %v370 = vpop.f32.mrf.mxu0
    %v371 = vadd.f32 %v351, %v370
    %372 = vdwg.mxu0
    %373 = vmatpush.msra.mxu0 %v228
    %374 = vmatpush.msra.mxu0 %v227
    %375 = vmatpush.msra.mxu0 %v226
    %376 = vmatpush.msra.mxu0 %v225
    %377 = vmatpush.msra.mxu0 %v224
    %378 = vmatpush.msra.mxu0 %v223
    %379 = vmatpush.msra.mxu0 %v222
    %380 = vmatpush.msra.mxu0 %v221
    %381 = vmatpush.msra.mxu0 %v220
    %382 = vmatpush.msra.mxu0 %v219
    %383 = vmatpush.msra.mxu0 %v218
    %384 = vmatpush.msra.mxu0 %v217
    %385 = vmatpush.msra.mxu0 %v216
    %386 = vmatpush.msra.mxu0 %v215
    %387 = vmatpush.msra.mxu0 %v214
    %388 = vmatpush.msra.mxu0 %v213
    %389 = vmatmul.f32.gmra.mxu0 %v100
    %v390 = vpop.f32.mrf.mxu0
    %v391 = vadd.f32 %v371, %v390
    %392 = vdwg.mxu0
    %393 = vst [vmem:[#allocation8] sm:$0xff] %v391
    // Predicated region
    $region30: #{tpu_custom_call.1} parent=1 // pred_check
      _
    $region31: #{tpu_custom_call.1} parent=1 // pred_check_branch
      %395 = sbr.rel (0) target = $region33
    $region32: #{tpu_custom_call.1} parent=1 // pred_region
      %397 = vsyncadd [#allocation4], 0
      %s399 = sshll.u32 [#allocation8], 4
      %s400 = int_to_ptr.vmem [resolvable:$true] %s399
      %s401 = sshll.u32 %s4, 4
      %s402 = int_to_ptr.hbm [resolvable:$true] %s401
      %404 = dma.vmem_to_hbm [thread:$0]  %s400, 128, %s402, [#allocation4]
    $region33: #{tpu_custom_call.1} parent=1 // pred_fallthru
      _
    // Predicated region
    $region34: #{tpu_custom_call.1} parent=1 // pred_check
      _
    $region35: #{tpu_custom_call.1} parent=1 // pred_check_branch
      %406 = sbr.rel (0) target = $region37
    $region36: #{tpu_custom_call.1} parent=1 // pred_region
      %408 = dma.done [#allocation4], 128
    $region37: #{tpu_custom_call.1} parent=1 // pred_fallthru
      _
    %409 = vsyncpa [#allocation3], 1
    %410 = vsyncpa [#allocation6], 1
    %411 = vsyncpa [#allocation4], 1

</llo_original>
